<compile_context>
chip_gen: v6e
topology: v6e:2x2x1
jax: 0.10.0
libtpu: 0.0.40
codegen_flags: <defaults>
</compile_context>

<pallas_src>
import functools

import jax
import jax.numpy as jnp
from jax.experimental import pallas as pl
from jax.experimental.pallas import tpu as pltpu

NEG_INF = float("-inf")


# --------------------------------------------------------------------------
# Kernel
# --------------------------------------------------------------------------
def _pooling_kernel(x_ref, len_ref, w1cat_ref, b1_ref, w2_ref, wl_ref, out_ref,
                    *, hidden, fuse_latt, mm_dtype, mxu_reduce):
    """One grid step processes a block of Bt batch rows.

    x_ref     : (Bt, L, D)   f32 or bf16 activation stream
    len_ref   : (Bt, 1, 1)   i32   real (non-pad) tokens per row
    w1cat_ref : (D, H[+1])   f32   FFN linear1 W, optionally fused with latt W
    b1_ref    : (1, H)       f32   FFN linear1 bias
    w2_ref    : (H, 1)       f32   FFN linear2 W
    wl_ref    : (1, D)       f32   LinearSeqAttn W (used when not fused)
    out_ref   : (Bt, 5, D)   f32   [max, mean, sum, latt, att] on axis 1
    """
    x_raw = x_ref[...]
    x = x_raw.astype(jnp.float32)
    bt, sl, d = x.shape
    h_dim = hidden

    len_raw = len_ref[...]                          # (Bt,1,1) i32
    lens = jnp.maximum(len_raw, 1)                  # guard zero-length rows
    row_ok = (len_raw > 0).astype(jnp.float32)      # zero outputs for empties

    pos = jax.lax.broadcasted_iota(jnp.int32, (bt, sl, 1), 1)
    valid = pos < lens                              # (Bt, L, 1) bool
    keep = valid.astype(jnp.float32)

    # ---- score / FFN matmuls: one (Bt*L, D) @ (D, H[+1]) MXU pass ----------
    if mm_dtype is not None:
        lhs = x_raw.astype(mm_dtype).reshape(bt * sl, d)
        w1cat = w1cat_ref[...].astype(mm_dtype)
    else:
        lhs = x.reshape(bt * sl, d)
        w1cat = w1cat_ref[...]
    hs = jnp.dot(lhs, w1cat, preferred_element_type=jnp.float32)   # (Bt*L,H[+1])
    h = jnp.maximum(hs[:, :h_dim] + b1_ref[...], 0.0)              # relu hidden
    if mm_dtype is not None:
        h_mm, w2 = h.astype(mm_dtype), w2_ref[...].astype(mm_dtype)
    else:
        h_mm, w2 = h, w2_ref[...]
    s_ffn = jnp.dot(h_mm, w2, preferred_element_type=jnp.float32)
    s_ffn = s_ffn.reshape(bt, sl, 1)                               # att logits

    if fuse_latt:
        # latt logits come from the fused extra column of w1cat.
        s_lin = hs[:, h_dim:h_dim + 1].reshape(bt, sl, 1)
    else:
        # v5e-friendly: keeps the first matmul at N=H (no 129-col MXU group);
        # latt logits via a VPU multiply + lane reduce instead.
        s_lin = jnp.sum(x * wl_ref[...].reshape(1, 1, d), axis=2, keepdims=True)
    # (score-head biases omitted: softmax(s + c) == softmax(s))

    def masked_softmax(s):                                         # (Bt, L, 1)
        s = jnp.where(valid, s, NEG_INF)
        m = jnp.max(s, axis=1, keepdims=True)
        e = jnp.exp(s - m)                                         # pads -> 0
        denom = jnp.sum(e, axis=1, keepdims=True)
        return e * pl.reciprocal(denom, approx=True)

    alpha1 = masked_softmax(s_lin)
    alpha2 = masked_softmax(s_ffn)

    max_p = jnp.max(jnp.where(valid, x, NEG_INF), axis=1, keepdims=True)
    inv_n = 1.0 / lens.astype(jnp.float32)          # exact: mean parity w/ torch

    if mxu_reduce:
        # v7x: the VPU is the binding unit while the MXU sits idle -> run the
        # three weighted reductions as one batched matmul.
        w3 = jnp.swapaxes(jnp.concatenate([keep, alpha1, alpha2], axis=2), 1, 2)
        pooled = jnp.einsum("bkl,bld->bkd", w3, x,
                            preferred_element_type=jnp.float32)    # sum,latt,att
        sum_p = pooled[:, 0:1, :]
        mean_p = sum_p * inv_n
        out = jnp.concatenate([max_p, mean_p, pooled], axis=1)
    else:
        sum_p = jnp.sum(x * keep, axis=1, keepdims=True)
        mean_p = sum_p * inv_n
        latt_p = jnp.sum(alpha1 * x, axis=1, keepdims=True)
        att_p = jnp.sum(alpha2 * x, axis=1, keepdims=True)
        out = jnp.concatenate([max_p, mean_p, sum_p, latt_p, att_p], axis=1)

    # Single dense full-block store; empty rows -> 0 (never NaN/Inf).
    out_ref[...] = out * row_ok


# --------------------------------------------------------------------------
# Host-side helpers
# --------------------------------------------------------------------------
def _rup(v, m):
    return (v + m - 1) // m * m


def _cdiv(a, b):
    return -(-a // b)


@functools.lru_cache(maxsize=None)
def _hw_info():
    """Best-effort TPU generation / VMEM-capacity detection."""
    kind = ""
    try:
        kind = jax.devices()[0].device_kind.lower()
    except Exception:
        pass
    is_v5 = "v5" in kind
    is_v7 = ("v7" in kind) or ("tpu7" in kind) or ("7x" in kind)
    vmem_cap = (64 if is_v7 else 128) * 2**20
    try:
        cap = int(pltpu.get_tpu_info().vmem_capacity_bytes)
        if cap > 0:
            vmem_cap = cap
    except Exception:
        pass
    return is_v5, is_v7, vmem_cap


def _vmem_estimate(bt, lp, dp, h, w1_cols, x_itemsize):
    """Double-buffered streams + matmul/elementwise temps, tile-padded."""
    f = 4
    xblk = bt * _rup(lp, 8) * _rup(dp, 128)
    rows = _rup(bt * lp, 8)
    return int(
        2 * xblk * x_itemsize                          # x
        + 2 * bt * 8 * 128 * 4                         # lengths (padded tile)
        + 2 * _rup(dp, 8) * _rup(w1_cols, 128) * f     # [w1 | wl]
        + 2 * 8 * _rup(h, 128) * f                     # b1
        + 2 * _rup(h, 8) * 128 * f                     # w2
        + 2 * 8 * _rup(dp, 128) * f                    # wl row
        + 2 * bt * 8 * _rup(dp, 128) * f               # out block (5 -> 8 subl)
        + 2 * rows * (_rup(w1_cols, 128) + _rup(h, 128)) * f   # hs / relu hidden
        + 3 * xblk * f)                                # elementwise temps


@functools.partial(
    jax.jit,
    static_argnames=("bt", "fuse_latt", "use_bf16_mm", "mxu_reduce",
                     "pad_l", "pad_d", "vmem_limit"))
def _pooling_call(x, lengths, wl, w1, b1, w2, *, bt, fuse_latt, use_bf16_mm,
                  mxu_reduce, pad_l, pad_d, vmem_limit):
    B, L, D = x.shape
    H = w1.shape[1]
    Lp, Dp = L + pad_l, D + pad_d

    # bf16 activations stay bf16 (halves the dominant HBM stream); otherwise f32.
    if x.dtype != jnp.bfloat16:
        x = x.astype(jnp.float32)
    if pad_l or pad_d:
        x = jnp.pad(x, ((0, 0), (0, pad_l), (0, pad_d)))

    w1 = w1.astype(jnp.float32)
    wl = wl.astype(jnp.float32)
    if pad_d:
        w1 = jnp.pad(w1, ((0, pad_d), (0, 0)))
        wl = jnp.pad(wl, ((0, pad_d), (0, 0)))
    w1cat = jnp.concatenate([w1, wl], axis=1) if fuse_latt else w1  # (Dp, H[+1])
    wl_row = wl.reshape(1, Dp)
    b1 = b1.astype(jnp.float32).reshape(1, H)
    w2 = w2.astype(jnp.float32)
    lens3 = lengths.astype(jnp.int32).reshape(B, 1, 1)

    kernel = functools.partial(
        _pooling_kernel, hidden=H, fuse_latt=fuse_latt,
        mm_dtype=jnp.bfloat16 if use_bf16_mm else None,
        mxu_reduce=mxu_reduce)

    # cdiv grid: last block may be partial; its extra rows hold garbage that
    # never mixes across rows and is dropped on write-back.
    grid = (_cdiv(B, bt),)
    grid_spec = pltpu.PrefetchScalarGridSpec(
        num_scalar_prefetch=0,
        grid=grid,
        in_specs=[
            pl.BlockSpec((bt, Lp, Dp), lambda b: (b, 0, 0)),        # x
            pl.BlockSpec((bt, 1, 1), lambda b: (b, 0, 0)),          # lengths
            pl.BlockSpec((Dp, w1cat.shape[1]), lambda b: (0, 0)),   # [w1 | wl]
            pl.BlockSpec((1, H), lambda b: (0, 0)),                 # b1
            pl.BlockSpec((H, 1), lambda b: (0, 0)),                 # w2
            pl.BlockSpec((1, Dp), lambda b: (0, 0)),                # wl row
        ],
        out_specs=pl.BlockSpec((bt, 5, Dp), lambda b: (b, 0, 0)),
    )
    out = pl.pallas_call(
        kernel,
        out_shape=jax.ShapeDtypeStruct((B, 5, Dp), jnp.float32),
        grid_spec=grid_spec,
        compiler_params=pltpu.CompilerParams(
            dimension_semantics=("parallel",),
            vmem_limit_bytes=vmem_limit),
    )(x, lens3, w1cat, b1, w2, wl_row)

    if pad_d:
        out = out[:, :, :D]
    # torch.cat(results, -1): row-major (B, 5, D) -> (B, 5*D) is exactly that.
    return out.reshape(B, 5 * D)


def pooling_forward(x, lengths, wl, bl, w1, b1, w2, b2, *,
                    matmul_dtype="auto", mxu_reduce="auto", fuse_latt="auto",
                    block_target_bytes=4 * 2**20):
    """Pooling('max,mean,sum,latt,att') forward.

    x: (B, L, D) f32 or bf16; lengths: (B,) int (real tokens per row).
    wl/bl: LinearSeqAttnPooling linear (D,1)/(1,1).
    w1/b1/w2/b2: NonLinearSeqAttnPooling FFN (D,H)/(1,H)/(H,1)/(1,1), relu.
    Returns (B, 5*D) = torch.cat([max, mean, sum, latt, att], -1).
    """
    del bl, b2   # softmax shift-invariance: score biases cannot affect output
    B, L, D = x.shape
    H = w1.shape[1]
    is_v5, is_v7, vmem_cap = _hw_info()

    # ---- generation-aware static knobs ------------------------------------
    if matmul_dtype == "auto":
        use_bf16_mm = is_v5                 # v5e MXU has no native f32 path
    elif matmul_dtype in (None, "f32", "float32", jnp.float32):
        use_bf16_mm = False
    else:
        use_bf16_mm = True
    do_mxu_reduce = is_v7 if mxu_reduce == "auto" else bool(mxu_reduce)
    mxu_width = 128 if is_v5 else 256
    do_fuse_latt = ((H + 1) <= mxu_width) if fuse_latt == "auto" else bool(fuse_latt)

    # ---- pad L (sublane) / D (lane) when the overhead is modest ------------
    def _pad_amt(v, m):
        p = _rup(v, m)
        return (p - v) if (p != v and p <= int(1.5 * v)) else 0
    pad_l = _pad_amt(L, 8)
    pad_d = _pad_amt(D, 128)
    Lp, Dp = L + pad_l, D + pad_d

    # ---- pick Bt from a VMEM byte target (no divisibility requirement) -----
    x_itemsize = 2 if x.dtype == jnp.bfloat16 else 4
    row_bytes = _rup(Lp, 8) * _rup(Dp, 128) * x_itemsize
    bt = max(1, min(B, block_target_bytes // row_bytes))
    min_steps = 4 if is_v7 else 2           # >= 2 grid steps per TensorCore
    bt = max(1, min(bt, _cdiv(B, min_steps)))
    vmem_ceiling = min(int(0.78 * vmem_cap), 100 * 2**20)
    w1_cols = H + 1 if do_fuse_latt else H
    while bt > 1 and int(1.3 * _vmem_estimate(bt, Lp, Dp, H, w1_cols,
                                              x_itemsize)) > vmem_ceiling:
        bt -= 1
    vmem_limit = int(min(max(int(1.3 * _vmem_estimate(bt, Lp, Dp, H, w1_cols,
                                                      x_itemsize)),
                             16 * 2**20), vmem_ceiling))

    return _pooling_call(x, lengths, wl, w1, b1, w2,
                         bt=bt, fuse_latt=do_fuse_latt,
                         use_bf16_mm=use_bf16_mm, mxu_reduce=do_mxu_reduce,
                         pad_l=pad_l, pad_d=pad_d, vmem_limit=vmem_limit)


# --------------------------------------------------------------------------
# Pure-JAX reference (mask: 1 = real token, matching the PyTorch semantics)
# --------------------------------------------------------------------------
def reference(x, mask, wl, bl, w1, b1, w2, b2):
    keep = mask.astype(jnp.float32)
    pad = 1.0 - keep
    max_p = jnp.max(jnp.where(pad[..., None] > 0, -jnp.inf, x), axis=1)
    sum_p = jnp.sum(x * keep[..., None], axis=1)
    mean_p = sum_p / jnp.sum(keep, axis=1, keepdims=True)

    def attn(scores):
        scores = jnp.where(pad > 0, -jnp.inf, scores)
        alpha = jax.nn.softmax(scores, axis=-1)
        return jnp.einsum("bl,bld->bd", alpha, x)

    s_lin = jnp.einsum("bld,do->bl", x, wl) + bl[0, 0]
    latt_p = attn(s_lin)
    h = jax.nn.relu(jnp.einsum("bld,dh->blh", x, w1) + b1[0])
    s_ffn = jnp.einsum("blh,ho->bl", h, w2) + b2[0, 0]
    att_p = attn(s_ffn)
    return jnp.concatenate([max_p, mean_p, sum_p, latt_p, att_p], axis=-1)


# --------------------------------------------------------------------------
# Tests
# --------------------------------------------------------------------------
if __name__ == "__main__":
    def make_params(key, D, H):
        kwl, kbl, kw1, kb1, kw2, kb2 = jax.random.split(key, 6)
        wl = 0.1 * jax.random.normal(kwl, (D, 1), dtype=jnp.float32)
        bl = 0.1 * jax.random.normal(kbl, (1, 1), dtype=jnp.float32)
        w1 = 0.1 * jax.random.normal(kw1, (D, H), dtype=jnp.float32)
        b1 = 0.1 * jax.random.normal(kb1, (1, H), dtype=jnp.float32)
        w2 = 0.1 * jax.random.normal(kw2, (H, 1), dtype=jnp.float32)
        b2 = 0.1 * jax.random.normal(kb2, (1, 1), dtype=jnp.float32)
        return wl, bl, w1, b1, w2, b2

    key = jax.random.PRNGKey(0)
    k1, k2, kp1, kp2 = jax.random.split(key, 4)

    # ---- config 1: B=2, L=8, D=32, H=128 (module's default hidden) ---------
    B, L, D, H = 2, 8, 32, 128
    x = jax.random.normal(k1, (B, L, D), dtype=jnp.float32)
    lengths = jnp.array([L, 5], dtype=jnp.int32)
    mask = (jnp.arange(L)[None, :] < lengths[:, None]).astype(jnp.float32)
    params = make_params(kp1, D, H)
    ref = reference(x, mask, *params)

    def run(xx=x, **kw):
        return jax.block_until_ready(pooling_forward(xx, lengths, *params, **kw))

    # exact path: f32 matmuls, VPU reductions, fused latt head
    out = run(matmul_dtype="f32", mxu_reduce=False, fuse_latt=True)
    assert out.shape == (B, 5 * D), out.shape
    assert jnp.allclose(out, ref, atol=2e-3, rtol=2e-3), (
        float(jnp.max(jnp.abs(out - ref))))

    # un-fused latt head (v5e-friendly N=128 matmul), still exact
    out = run(matmul_dtype="f32", mxu_reduce=False, fuse_latt=False)
    assert jnp.allclose(out, ref, atol=2e-3, rtol=2e-3), (
        float(jnp.max(jnp.abs(out - ref))))

    # MXU-offloaded weighted reductions (v7x default path)
    out = run(matmul_dtype="f32", mxu_reduce=True)
    assert jnp.allclose(out, ref, atol=5e-2, rtol=5e-2), (
        float(jnp.max(jnp.abs(out - ref))))

    # bf16 score/FFN matmuls (v5e default path); pooling math stays f32
    out = run(matmul_dtype="bf16", mxu_reduce=False)
    assert jnp.allclose(out, ref, atol=1e-1, rtol=1e-1), (
        float(jnp.max(jnp.abs(out - ref))))

    # generation-aware defaults for whatever chip we are on
    out = run()
    assert jnp.allclose(out, ref, atol=1e-1, rtol=1e-1), (
        float(jnp.max(jnp.abs(out - ref))))

    # bf16 activation stream (halves the dominant HBM traffic)
    out = run(xx=x.astype(jnp.bfloat16), matmul_dtype="f32", mxu_reduce=False)
    assert jnp.allclose(out, ref, atol=5e-2, rtol=5e-2), (
        float(jnp.max(jnp.abs(out - ref))))

    # ---- config 2: unaligned L/D (wrapper pads), non-divisible batch tail,
    #      and a zero-length row (clamped + zeroed, never NaN) ---------------
    B2, L2, D2, H2 = 5, 11, 200, 64
    x2 = jax.random.normal(k2, (B2, L2, D2), dtype=jnp.float32)
    lengths2 = jnp.array([11, 7, 0, 5, 1], dtype=jnp.int32)
    mask2 = (jnp.arange(L2)[None, :] < lengths2[:, None]).astype(jnp.float32)
    params2 = make_params(kp2, D2, H2)
    ref2 = reference(x2, mask2, *params2)
    out2 = jax.block_until_ready(
        pooling_forward(x2, lengths2, *params2, matmul_dtype="f32",
                        mxu_reduce=False))
    assert out2.shape == (B2, 5 * D2), out2.shape
    rows = jnp.array([0, 1, 3, 4])                 # rows with >=1 real token
    assert jnp.allclose(out2[rows], ref2[rows], atol=2e-2, rtol=2e-2), (
        float(jnp.max(jnp.abs(out2[rows] - ref2[rows]))))
    assert bool(jnp.all(out2[2] == 0.0))           # empty row -> zeros, no NaN

    print("KERNEL_OK")
</pallas_src>

<mosaic_0001>
module attributes {stable_mosaic.version = 11 : i64} {
  func.func @_pooling_kernel(%arg0: i32, %arg1: memref<1x8x32xf32, #tpu.memory_space<vmem>>, %arg2: memref<1x1x1xi32, #tpu.memory_space<vmem>>, %arg3: memref<32x129xf32, #tpu.memory_space<vmem>>, %arg4: memref<1x128xf32, #tpu.memory_space<vmem>>, %arg5: memref<128x1xf32, #tpu.memory_space<vmem>>, %arg6: memref<1x32xf32, #tpu.memory_space<vmem>>, %arg7: memref<1x5x32xf32, #tpu.memory_space<vmem>>) attributes {dimension_semantics = [#tpu.dimension_semantics<parallel>], iteration_bounds = array<i64: 2>, scalar_prefetch = 0 : i64, scratch_operands = 0 : i64, tpu.core_type = #tpu.core_type<tc>, window_params = [{transform_indices = @transform_0, window_bounds = array<i64: 1, 8, 32>}, {transform_indices = @transform_1, window_bounds = array<i64: 1, 1, 1>}, {pipeline_mode = #tpu.pipeline_mode<synchronous>, transform_indices = @transform_2, window_bounds = array<i64: 32, 129>}, {pipeline_mode = #tpu.pipeline_mode<synchronous>, transform_indices = @transform_3, window_bounds = array<i64: 1, 128>}, {pipeline_mode = #tpu.pipeline_mode<synchronous>, transform_indices = @transform_4, window_bounds = array<i64: 128, 1>}, {pipeline_mode = #tpu.pipeline_mode<synchronous>, transform_indices = @transform_5, window_bounds = array<i64: 1, 32>}, {transform_indices = @transform_6, window_bounds = array<i64: 1, 5, 32>}]} {
    %c0 = arith.constant 0 : index
    %c0_0 = arith.constant 0 : index
    %c0_1 = arith.constant 0 : index
    %0 = vector.load %arg1[%c0, %c0_0, %c0_1] : memref<1x8x32xf32, #tpu.memory_space<vmem>>, vector<1x8x32xf32>
    %c0_2 = arith.constant 0 : index
    %c0_3 = arith.constant 0 : index
    %c0_4 = arith.constant 0 : index
    %1 = vector.load %arg2[%c0_2, %c0_3, %c0_4] : memref<1x1x1xi32, #tpu.memory_space<vmem>>, vector<1x1x1xi32>
    %c1_i32 = arith.constant 1 : i32
    %2 = vector.broadcast %c1_i32 : i32 to vector<1x1x1xi32>
    %3 = arith.maxsi %1, %2 : vector<1x1x1xi32>
    %c0_i32 = arith.constant 0 : i32
    %4 = vector.broadcast %c0_i32 : i32 to vector<1x1x1xi32>
    %5 = arith.cmpi sgt, %1, %4 : vector<1x1x1xi32>
    %6 = arith.extui %5 : vector<1x1x1xi1> to vector<1x1x1xi32>
    %7 = arith.sitofp %6 : vector<1x1x1xi32> to vector<1x1x1xf32>
    %8 = tpu.iota {dimensions = array<i32: 1>} : vector<1x8x1xi32>
    %9 = vector.broadcast %3 : vector<1x1x1xi32> to vector<1x8x1xi32>
    %10 = arith.cmpi slt, %8, %9 : vector<1x8x1xi32>
    %11 = arith.extui %10 : vector<1x8x1xi1> to vector<1x8x1xi32>
    %12 = arith.sitofp %11 : vector<1x8x1xi32> to vector<1x8x1xf32>
    %13 = vector.shape_cast %0 : vector<1x8x32xf32> to vector<8x32xf32>
    %c0_5 = arith.constant 0 : index
    %c0_6 = arith.constant 0 : index
    %14 = vector.load %arg3[%c0_5, %c0_6] : memref<32x129xf32, #tpu.memory_space<vmem>>, vector<32x129xf32>
    %cst = arith.constant dense<0.000000e+00> : vector<8x129xf32>
    %15 = tpu.matmul %13, %14, %cst {dimension_numbers = #tpu.dot_dimension_numbers<[1], [0], [0], [1], [0, 0, 1, 1], [], []>} : vector<8x32xf32>, vector<32x129xf32>, vector<8x129xf32> -> vector<8x129xf32>
    %16 = vector.extract_strided_slice %15 {offsets = [0, 0], sizes = [8, 128], strides = [1, 1]} : vector<8x129xf32> to vector<8x128xf32>
    %c0_7 = arith.constant 0 : index
    %c0_8 = arith.constant 0 : index
    %17 = vector.load %arg4[%c0_7, %c0_8] : memref<1x128xf32, #tpu.memory_space<vmem>>, vector<1x128xf32>
    %18 = vector.broadcast %17 : vector<1x128xf32> to vector<8x128xf32>
    %19 = arith.addf %16, %18 : vector<8x128xf32>
    %cst_9 = arith.constant 0.000000e+00 : f32
    %20 = vector.broadcast %cst_9 : f32 to vector<8x128xf32>
    %21 = arith.maximumf %19, %20 : vector<8x128xf32>
    %c0_10 = arith.constant 0 : index
    %c0_11 = arith.constant 0 : index
    %22 = vector.load %arg5[%c0_10, %c0_11] : memref<128x1xf32, #tpu.memory_space<vmem>>, vector<128x1xf32>
    %cst_12 = arith.constant dense<0.000000e+00> : vector<8x1xf32>
    %23 = tpu.matmul %21, %22, %cst_12 {dimension_numbers = #tpu.dot_dimension_numbers<[1], [0], [0], [1], [0, 0, 1, 1], [], []>} : vector<8x128xf32>, vector<128x1xf32>, vector<8x1xf32> -> vector<8x1xf32>
    %24 = vector.shape_cast %23 : vector<8x1xf32> to vector<1x8x1xf32>
    %25 = vector.extract_strided_slice %15 {offsets = [0, 128], sizes = [8, 1], strides = [1, 1]} : vector<8x129xf32> to vector<8x1xf32>
    %26 = vector.shape_cast %25 : vector<8x1xf32> to vector<1x8x1xf32>
    %cst_13 = arith.constant 0xFF800000 : f32
    %27 = vector.broadcast %cst_13 : f32 to vector<1x8x1xf32>
    %28 = arith.select %10, %26, %27 : vector<1x8x1xi1>, vector<1x8x1xf32>
    %cst_14 = arith.constant dense<0xFF800000> : vector<1x1xf32>
    %29 = vector.multi_reduction <maximumf>, %28, %cst_14 [1] : vector<1x8x1xf32> to vector<1x1xf32>
    %30 = vector.shape_cast %29 : vector<1x1xf32> to vector<1x1x1xf32>
    %31 = vector.broadcast %30 : vector<1x1x1xf32> to vector<1x8x1xf32>
    %32 = arith.subf %28, %31 : vector<1x8x1xf32>
    %33 = math.exp %32 : vector<1x8x1xf32>
    %cst_15 = arith.constant dense<0.000000e+00> : vector<1x1xf32>
    %34 = vector.multi_reduction <add>, %33, %cst_15 [1] : vector<1x8x1xf32> to vector<1x1xf32>
    %35 = vector.shape_cast %34 : vector<1x1xf32> to vector<1x1x1xf32>
    %36 = tpu.reciprocal %35 {approx = true} : vector<1x1x1xf32> -> vector<1x1x1xf32>
    %37 = vector.broadcast %36 : vector<1x1x1xf32> to vector<1x8x1xf32>
    %38 = arith.mulf %33, %37 : vector<1x8x1xf32>
    %cst_16 = arith.constant 0xFF800000 : f32
    %39 = vector.broadcast %cst_16 : f32 to vector<1x8x1xf32>
    %40 = arith.select %10, %24, %39 : vector<1x8x1xi1>, vector<1x8x1xf32>
    %cst_17 = arith.constant dense<0xFF800000> : vector<1x1xf32>
    %41 = vector.multi_reduction <maximumf>, %40, %cst_17 [1] : vector<1x8x1xf32> to vector<1x1xf32>
    %42 = vector.shape_cast %41 : vector<1x1xf32> to vector<1x1x1xf32>
    %43 = vector.broadcast %42 : vector<1x1x1xf32> to vector<1x8x1xf32>
    %44 = arith.subf %40, %43 : vector<1x8x1xf32>
    %45 = math.exp %44 : vector<1x8x1xf32>
    %cst_18 = arith.constant dense<0.000000e+00> : vector<1x1xf32>
    %46 = vector.multi_reduction <add>, %45, %cst_18 [1] : vector<1x8x1xf32> to vector<1x1xf32>
    %47 = vector.shape_cast %46 : vector<1x1xf32> to vector<1x1x1xf32>
    %48 = tpu.reciprocal %47 {approx = true} : vector<1x1x1xf32> -> vector<1x1x1xf32>
    %49 = vector.broadcast %48 : vector<1x1x1xf32> to vector<1x8x1xf32>
    %50 = arith.mulf %45, %49 : vector<1x8x1xf32>
    %cst_19 = arith.constant 0xFF800000 : f32
    %51 = vector.shape_cast %10 : vector<1x8x1xi1> to vector<1x8x1xi1>
    %52 = vector.broadcast %51 : vector<1x8x1xi1> to vector<1x8x32xi1>
    %53 = vector.broadcast %cst_19 : f32 to vector<1x8x32xf32>
    %54 = arith.select %52, %0, %53 : vector<1x8x32xi1>, vector<1x8x32xf32>
    %cst_20 = arith.constant dense<0xFF800000> : vector<1x32xf32>
    %55 = vector.multi_reduction <maximumf>, %54, %cst_20 [1] : vector<1x8x32xf32> to vector<1x32xf32>
    %56 = vector.shape_cast %55 : vector<1x32xf32> to vector<1x1x32xf32>
    %57 = arith.sitofp %3 : vector<1x1x1xi32> to vector<1x1x1xf32>
    %cst_21 = arith.constant 1.000000e+00 : f32
    %58 = vector.broadcast %cst_21 : f32 to vector<1x1x1xf32>
    %59 = arith.divf %58, %57 : vector<1x1x1xf32>
    %60 = vector.broadcast %12 : vector<1x8x1xf32> to vector<1x8x32xf32>
    %61 = arith.mulf %0, %60 : vector<1x8x32xf32>
    %cst_22 = arith.constant dense<0.000000e+00> : vector<1x32xf32>
    %62 = vector.multi_reduction <add>, %61, %cst_22 [1] : vector<1x8x32xf32> to vector<1x32xf32>
    %63 = vector.shape_cast %62 : vector<1x32xf32> to vector<1x1x32xf32>
    %64 = vector.broadcast %59 : vector<1x1x1xf32> to vector<1x1x32xf32>
    %65 = arith.mulf %63, %64 : vector<1x1x32xf32>
    %66 = vector.broadcast %38 : vector<1x8x1xf32> to vector<1x8x32xf32>
    %67 = arith.mulf %66, %0 : vector<1x8x32xf32>
    %cst_23 = arith.constant dense<0.000000e+00> : vector<1x32xf32>
    %68 = vector.multi_reduction <add>, %67, %cst_23 [1] : vector<1x8x32xf32> to vector<1x32xf32>
    %69 = vector.shape_cast %68 : vector<1x32xf32> to vector<1x1x32xf32>
    %70 = vector.broadcast %50 : vector<1x8x1xf32> to vector<1x8x32xf32>
    %71 = arith.mulf %70, %0 : vector<1x8x32xf32>
    %cst_24 = arith.constant dense<0.000000e+00> : vector<1x32xf32>
    %72 = vector.multi_reduction <add>, %71, %cst_24 [1] : vector<1x8x32xf32> to vector<1x32xf32>
    %73 = vector.shape_cast %72 : vector<1x32xf32> to vector<1x1x32xf32>
    %74 = tpu.concatenate %56, %65, %63, %69, %73 in 1 : vector<1x1x32xf32>, vector<1x1x32xf32>, vector<1x1x32xf32>, vector<1x1x32xf32>, vector<1x1x32xf32> -> vector<1x5x32xf32>
    %75 = vector.broadcast %7 : vector<1x1x1xf32> to vector<1x5x32xf32>
    %76 = arith.mulf %74, %75 : vector<1x5x32xf32>
    %c0_25 = arith.constant 0 : index
    %c0_26 = arith.constant 0 : index
    %c0_27 = arith.constant 0 : index
    %77 = vector.load %arg7[%c0_25, %c0_26, %c0_27] : memref<1x5x32xf32, #tpu.memory_space<vmem>>, vector<1x5x32xf32>
    tpu.vector_store %arg7[%c0_25, %c0_26, %c0_27], %76 {strides = array<i32>} : memref<1x5x32xf32, #tpu.memory_space<vmem>>, vector<1x5x32xf32>,
    return
  }
  func.func @transform_0(%arg0: i32) -> (i32, i32, i32) {
    %c0_i32 = arith.constant 0 : i32
    %c0_i32_0 = arith.constant 0 : i32
    %c0_i32_1 = arith.constant 0 : i32
    return %arg0, %c0_i32, %c0_i32_0 : i32, i32, i32
  }
  func.func @transform_1(%arg0: i32) -> (i32, i32, i32) {
    %c0_i32 = arith.constant 0 : i32
    %c0_i32_0 = arith.constant 0 : i32
    %c0_i32_1 = arith.constant 0 : i32
    return %arg0, %c0_i32, %c0_i32_0 : i32, i32, i32
  }
  func.func @transform_2(%arg0: i32) -> (i32, i32) {
    %c0_i32 = arith.constant 0 : i32
    %c0_i32_0 = arith.constant 0 : i32
    %c0_i32_1 = arith.constant 0 : i32
    return %c0_i32, %c0_i32_0 : i32, i32
  }
  func.func @transform_3(%arg0: i32) -> (i32, i32) {
    %c0_i32 = arith.constant 0 : i32
    %c0_i32_0 = arith.constant 0 : i32
    %c0_i32_1 = arith.constant 0 : i32
    return %c0_i32, %c0_i32_0 : i32, i32
  }
  func.func @transform_4(%arg0: i32) -> (i32, i32) {
    %c0_i32 = arith.constant 0 : i32
    %c0_i32_0 = arith.constant 0 : i32
    %c0_i32_1 = arith.constant 0 : i32
    return %c0_i32, %c0_i32_0 : i32, i32
  }
  func.func @transform_5(%arg0: i32) -> (i32, i32) {
    %c0_i32 = arith.constant 0 : i32
    %c0_i32_0 = arith.constant 0 : i32
    %c0_i32_1 = arith.constant 0 : i32
    return %c0_i32, %c0_i32_0 : i32, i32
  }
  func.func @transform_6(%arg0: i32) -> (i32, i32, i32) {
    %c0_i32 = arith.constant 0 : i32
    %c0_i32_0 = arith.constant 0 : i32
    %c0_i32_1 = arith.constant 0 : i32
    return %arg0, %c0_i32, %c0_i32_0 : i32, i32, i32
  }
}

</mosaic_0001>

<llo_original>
// kernel: _pooling_call.1
$region0: #{_pooling_call.1}
  #allocation0 [shape = 'u32[]', space=smem, size = 0x4, offset = 0x4, fixed_abs, tag = 'smem constant byte address 0x4 - core index']
  #allocation1 [shape = 'u32[144,128]{1,0:T(1,128)}', space=vmem, size = 0x12000, scoped, tag = 'internal scratch']
  %s0 = inlined_call_operand.vmem [shape: f32[2,8,32], index: 0, kind: input, shape index: {}]
  %s1 = inlined_call_operand.vmem [shape: s32[2,1,1], index: 1, kind: input, shape index: {}]
  %s2 = inlined_call_operand.vmem [shape: f32[32,129], index: 2, kind: input, shape index: {}]
  %s3 = inlined_call_operand.vmem [shape: f32[1,128], index: 3, kind: input, shape index: {}]
  %s4 = inlined_call_operand.vmem [shape: f32[128,1], index: 4, kind: input, shape index: {}]
  %s5 = inlined_call_operand.vmem [shape: f32[1,32], index: 5, kind: input, shape index: {}]
  %s6 = inlined_call_operand.vmem [shape: f32[2,5,32], index: 6, kind: output, shape index: {}]
  %s7 = sld [smem:[#allocation0]]
  $region57: #{_pooling_call.1} parent=0
    _
  %s9 = ssub.s32 1, %s7
  %s10 = scalar_select 0, %s9, %s7
  loop: start=0, step=1, limit=4
  $region2: #{_pooling_call.1} parent=0 // loop_pre_header
    _
  $region3: #{_pooling_call.1} parent=0 // loop_header
    %s12 = sphi 0, %s16
    %p13 = scmp.ge.s32.totalorder %s12, 4
    %s22 = sphi 0, %s24
    %s25 = sphi 0, %s22
    %s26 = sphi 0, %s25
    %s42 = sphi 0, %s26
    %s48 = sphi 0, %s50
    %s51 = sphi 0, %s48
    %s52 = sphi 0, %s51
    %s68 = sphi 0, %s52
    %s72 = sphi 0, %s72
    %s74 = sphi 0, %s72
    %s75 = sphi 0, %s74
    %s89 = sphi 0, %s75
    %s93 = sphi 0, %s93
    %s95 = sphi 0, %s93
    %s96 = sphi 0, %s95
    %s110 = sphi 0, %s96
    %s114 = sphi 0, %s114
    %s116 = sphi 0, %s114
    %s117 = sphi 0, %s116
    %s131 = sphi 0, %s117
    %s135 = sphi 0, %s135
    %s137 = sphi 0, %s135
    %s138 = sphi 0, %s137
    %s152 = sphi 0, %s138
    %s158 = sphi 0, %s160
    %s161 = sphi 0, %s158
    %s162 = sphi 0, %s161
    %s178 = sphi 0, %s162
  $region4: #{_pooling_call.1} parent=0 // loop_header_branch
    %15 = sbr.rel (%p13) target = $region8
  $region5: #{_pooling_call.1} parent=0 // loop_body
    %s17 = ssub.s32 %s12, 1
    %s18 = ssub.s32 %s12, 2
    %s19 = sadd.s32 %s12, 1
    %s20 = ssub.s32 %s12, %s19
    %p21 = scmp.eq.s32.totalorder %s20, 0
    %s23 = sadd.s32 %s22, 1
    %s24 = scalar_select %p21, %s22, %s23
    %p27 = pneg %p21
    %p28 = scmp.eq.s32.totalorder %s12, 1
    %p29 = por %p27, %p28
    %p30 = scmp.ne.s32.totalorder %s22, %s25
    %p31 = scmp.eq.s32.totalorder %s12, 0
    %p32 = por %p30, %p31
    %p33 = scmp.ne.s32.totalorder %s22, %s25
    %p34 = scmp.eq.s32.totalorder %s17, 1
    %p35 = por %p33, %p34
    %p36 = scmp.ne.s32.totalorder %s25, %s26
    %p37 = scmp.eq.s32.totalorder %s17, 0
    %p38 = por %p36, %p37
    %p39 = scmp.ne.s32.totalorder %s25, %s26
    %p40 = scmp.eq.s32.totalorder %s18, 1
    %p41 = por %p39, %p40
    %p43 = scmp.ne.s32.totalorder %s26, %s42
    %p44 = scmp.eq.s32.totalorder %s18, 0
    %p45 = por %p43, %p44
    %s46 = ssub.s32 %s12, %s19
    %p47 = scmp.eq.s32.totalorder %s46, 0
    %s49 = sadd.s32 %s48, 1
    %s50 = scalar_select %p47, %s48, %s49
    %p53 = pneg %p47
    %p54 = scmp.eq.s32.totalorder %s12, 1
    %p55 = por %p53, %p54
    %p56 = scmp.ne.s32.totalorder %s48, %s51
    %p57 = scmp.eq.s32.totalorder %s12, 0
    %p58 = por %p56, %p57
    %p59 = scmp.ne.s32.totalorder %s48, %s51
    %p60 = scmp.eq.s32.totalorder %s17, 1
    %p61 = por %p59, %p60
    %p62 = scmp.ne.s32.totalorder %s51, %s52
    %p63 = scmp.eq.s32.totalorder %s17, 0
    %p64 = por %p62, %p63
    %p65 = scmp.ne.s32.totalorder %s51, %s52
    %p66 = scmp.eq.s32.totalorder %s18, 1
    %p67 = por %p65, %p66
    %p69 = scmp.ne.s32.totalorder %s52, %s68
    %p70 = scmp.eq.s32.totalorder %s18, 0
    %p71 = por %p69, %p70
    %s73 = sadd.s32 %s72, 1
    %p76 = scmp.eq.s32.totalorder %s12, 1
    %p77 = scmp.ne.s32.totalorder %s72, %s74
    %p78 = scmp.eq.s32.totalorder %s12, 0
    %p79 = por %p77, %p78
    %p80 = scmp.ne.s32.totalorder %s72, %s74
    %p81 = scmp.eq.s32.totalorder %s17, 1
    %p82 = por %p80, %p81
    %p83 = scmp.ne.s32.totalorder %s74, %s75
    %p84 = scmp.eq.s32.totalorder %s17, 0
    %p85 = por %p83, %p84
    %p86 = scmp.ne.s32.totalorder %s74, %s75
    %p87 = scmp.eq.s32.totalorder %s18, 1
    %p88 = por %p86, %p87
    %p90 = scmp.ne.s32.totalorder %s75, %s89
    %p91 = scmp.eq.s32.totalorder %s18, 0
    %p92 = por %p90, %p91
    %s94 = sadd.s32 %s93, 1
    %p97 = scmp.eq.s32.totalorder %s12, 1
    %p98 = scmp.ne.s32.totalorder %s93, %s95
    %p99 = scmp.eq.s32.totalorder %s12, 0
    %p100 = por %p98, %p99
    %p101 = scmp.ne.s32.totalorder %s93, %s95
    %p102 = scmp.eq.s32.totalorder %s17, 1
    %p103 = por %p101, %p102
    %p104 = scmp.ne.s32.totalorder %s95, %s96
    %p105 = scmp.eq.s32.totalorder %s17, 0
    %p106 = por %p104, %p105
    %p107 = scmp.ne.s32.totalorder %s95, %s96
    %p108 = scmp.eq.s32.totalorder %s18, 1
    %p109 = por %p107, %p108
    %p111 = scmp.ne.s32.totalorder %s96, %s110
    %p112 = scmp.eq.s32.totalorder %s18, 0
    %p113 = por %p111, %p112
    %s115 = sadd.s32 %s114, 1
    %p118 = scmp.eq.s32.totalorder %s12, 1
    %p119 = scmp.ne.s32.totalorder %s114, %s116
    %p120 = scmp.eq.s32.totalorder %s12, 0
    %p121 = por %p119, %p120
    %p122 = scmp.ne.s32.totalorder %s114, %s116
    %p123 = scmp.eq.s32.totalorder %s17, 1
    %p124 = por %p122, %p123
    %p125 = scmp.ne.s32.totalorder %s116, %s117
    %p126 = scmp.eq.s32.totalorder %s17, 0
    %p127 = por %p125, %p126
    %p128 = scmp.ne.s32.totalorder %s116, %s117
    %p129 = scmp.eq.s32.totalorder %s18, 1
    %p130 = por %p128, %p129
    %p132 = scmp.ne.s32.totalorder %s117, %s131
    %p133 = scmp.eq.s32.totalorder %s18, 0
    %p134 = por %p132, %p133
    %s136 = sadd.s32 %s135, 1
    %p139 = scmp.eq.s32.totalorder %s12, 1
    %p140 = scmp.ne.s32.totalorder %s135, %s137
    %p141 = scmp.eq.s32.totalorder %s12, 0
    %p142 = por %p140, %p141
    %p143 = scmp.ne.s32.totalorder %s135, %s137
    %p144 = scmp.eq.s32.totalorder %s17, 1
    %p145 = por %p143, %p144
    %p146 = scmp.ne.s32.totalorder %s137, %s138
    %p147 = scmp.eq.s32.totalorder %s17, 0
    %p148 = por %p146, %p147
    %p149 = scmp.ne.s32.totalorder %s137, %s138
    %p150 = scmp.eq.s32.totalorder %s18, 1
    %p151 = por %p149, %p150
    %p153 = scmp.ne.s32.totalorder %s138, %s152
    %p154 = scmp.eq.s32.totalorder %s18, 0
    %p155 = por %p153, %p154
    %s156 = ssub.s32 %s12, %s19
    %p157 = scmp.eq.s32.totalorder %s156, 0
    %s159 = sadd.s32 %s158, 1
    %s160 = scalar_select %p157, %s158, %s159
    %p163 = pneg %p157
    %p164 = scmp.eq.s32.totalorder %s12, 1
    %p165 = por %p163, %p164
    %p166 = scmp.ne.s32.totalorder %s158, %s161
    %p167 = scmp.eq.s32.totalorder %s12, 0
    %p168 = por %p166, %p167
    %p169 = scmp.ne.s32.totalorder %s158, %s161
    %p170 = scmp.eq.s32.totalorder %s17, 1
    %p171 = por %p169, %p170
    %p172 = scmp.ne.s32.totalorder %s161, %s162
    %p173 = scmp.eq.s32.totalorder %s17, 0
    %p174 = por %p172, %p173
    %p175 = scmp.ne.s32.totalorder %s161, %s162
    %p176 = scmp.eq.s32.totalorder %s18, 1
    %p177 = por %p175, %p176
    %p179 = scmp.ne.s32.totalorder %s162, %s178
    %p180 = scmp.eq.s32.totalorder %s18, 0
    %p181 = por %p179, %p180
    %p182 = scmp.le.s32.totalorder 1, %s12
    %p183 = scmp.lt.s32.totalorder %s12, 3
    %p184 = pnand %p182, %p183
    %p185 = pneg %p184
    // Predicated region
    $region9: #{_pooling_call.1} parent=5 // pred_check
      _
    $region10: #{_pooling_call.1} parent=5 // pred_check_branch
      %187 = sbr.rel (%p184) target = $region12
    $region11: #{_pooling_call.1} parent=5 // pred_region
      %s188 = ssub.s32 %s12, 1
      // Predicated region
      $region13: #{_pooling_call.1} parent=11 // pred_check
        %p189 = pneg %p85
      $region14: #{_pooling_call.1} parent=11 // pred_check_branch
        %191 = sbr.rel (%p189) target = $region16
      $region15: #{_pooling_call.1} parent=11 // pred_region
        _
      $region16: #{_pooling_call.1} parent=11 // pred_fallthru
        _
      // Predicated region
      $region17: #{_pooling_call.1} parent=11 // pred_check
        %p192 = pneg %p106
      $region18: #{_pooling_call.1} parent=11 // pred_check_branch
        %194 = sbr.rel (%p192) target = $region20
      $region19: #{_pooling_call.1} parent=11 // pred_region
        _
      $region20: #{_pooling_call.1} parent=11 // pred_fallthru
        _
      // Predicated region
      $region21: #{_pooling_call.1} parent=11 // pred_check
        %p195 = pneg %p127
      $region22: #{_pooling_call.1} parent=11 // pred_check_branch
        %197 = sbr.rel (%p195) target = $region24
      $region23: #{_pooling_call.1} parent=11 // pred_region
        _
      $region24: #{_pooling_call.1} parent=11 // pred_fallthru
        _
      // Predicated region
      $region25: #{_pooling_call.1} parent=11 // pred_check
        %p198 = pneg %p148
      $region26: #{_pooling_call.1} parent=11 // pred_check_branch
        %200 = sbr.rel (%p198) target = $region28
      $region27: #{_pooling_call.1} parent=11 // pred_region
        _
      $region28: #{_pooling_call.1} parent=11 // pred_fallthru
        _
    $region12: #{_pooling_call.1} parent=5 // pred_fallthru
      _
    %p201 = scmp.lt.s32.totalorder %s12, 2
    // Predicated region
    $region29: #{_pooling_call.1} parent=5 // pred_check
      %p202 = pneg %p201
    $region30: #{_pooling_call.1} parent=5 // pred_check_branch
      %204 = sbr.rel (%p202) target = $region32
    $region31: #{_pooling_call.1} parent=5 // pred_region
      // Predicated region
      $region33: #{_pooling_call.1} parent=31 // pred_check
        %p205 = pneg %p32
      $region34: #{_pooling_call.1} parent=31 // pred_check_branch
        %207 = sbr.rel (%p205) target = $region36
      $region35: #{_pooling_call.1} parent=31 // pred_region
        %p208 = scmp.lt.s32.totalorder %s12, 1
        %s209 = scalar_select %p208, %s12, 1
        %s210 = smul.addr %s209, 8
        %s211 = scalar_lea.vmem %s0, %s210
      $region36: #{_pooling_call.1} parent=31 // pred_fallthru
        _
      // Predicated region
      $region37: #{_pooling_call.1} parent=31 // pred_check
        %p212 = pneg %p58
      $region38: #{_pooling_call.1} parent=31 // pred_check_branch
        %214 = sbr.rel (%p212) target = $region40
      $region39: #{_pooling_call.1} parent=31 // pred_region
        %p215 = scmp.lt.s32.totalorder %s12, 1
        %s216 = scalar_select %p215, %s12, 1
        %s217 = scalar_lea.vmem %s1, %s216
      $region40: #{_pooling_call.1} parent=31 // pred_fallthru
        _
    $region32: #{_pooling_call.1} parent=5 // pred_fallthru
      _
    %p218 = scmp.le.s32.totalorder 1, %s12
    %p219 = scmp.lt.s32.totalorder %s12, 3
    %p220 = pnand %p218, %p219
    %p221 = pneg %p220
    // Predicated region
    $region41: #{_pooling_call.1} parent=5 // pred_check
      _
    $region42: #{_pooling_call.1} parent=5 // pred_check_branch
      %223 = sbr.rel (%p220) target = $region44
    $region43: #{_pooling_call.1} parent=5 // pred_region
      %s224 = ssub.s32 %s12, 1
      %p225 = scmp.lt.s32.totalorder %s17, 1
      %s226 = scalar_select %p225, %s17, 1
      %s227 = smul.addr %s226, 8
      %s228 = scalar_lea.vmem %s0, %s227
      %p229 = pneg %p38
      %p230 = pneg %p35
      %p231 = scmp.lt.s32.totalorder %s17, 1
      %s232 = scalar_select %p231, %s17, 1
      %s233 = scalar_lea.vmem %s1, %s232
      %p234 = pneg %p64
      %p235 = pneg %p61
      %p236 = pneg %p85
      %p237 = pneg %p82
      %p238 = pneg %p106
      %p239 = pneg %p103
      %p240 = pneg %p127
      %p241 = pneg %p124
      %p242 = pneg %p148
      %p243 = pneg %p145
      %p244 = pneg %p174
      %p245 = pneg %p171
      %p246 = scmp.lt.s32.totalorder %s17, 1
      %s247 = scalar_select %p246, %s17, 1
      %s248 = smul.addr %s247, 8
      %s249 = scalar_lea.vmem %s6, %s248
      %p250 = scmp.lt.s32.totalorder %s17, 1
      %s251 = scalar_select %p250, %s17, 1
      %s252 = smul.addr %s251, 8
      %s253 = scalar_lea.vmem %s0, %s252
      %p254 = scmp.lt.s32.totalorder %s17, 1
      %s255 = scalar_select %p254, %s17, 1
      %s256 = scalar_lea.vmem %s1, %s255
      %p257 = scmp.lt.s32.totalorder %s17, 1
      %s258 = scalar_select %p257, %s17, 1
      %s259 = smul.addr %s258, 8
      %s260 = scalar_lea.vmem %s6, %s259
      %v261 = vld [vmem:[%s253] sm:$0xff]
      %v262 = vld [vmem:[%s256] sm:$0x1]
      %vm263 = vcmp.gt.s32.totalorder %v262, 1
      %v264 = vsel %vm263, %v262, 1
      %vm265 = vcmp.gt.s32.totalorder %v262, 0
      %v266 = vsel %vm265, 1, 0
      %v267 = vcvt.s32.f32 %v266
      %v268 = vlaneseq
      %v269 = vshrl.u32 %v268, 7
      %v270 = vlaneseq
      %v271 = vshrl.u32 %v270, 7
      %v272 = vsub.s32 0, %v271
      %v273 = vrot.slane %v264, %v272
      %vm274 = vcmp.lt.s32.totalorder %v269, %v273
      %v275 = vsel %vm274, 1, 0
      %v276 = vcvt.s32.f32 %v275
      %v277 = vld [vmem:[%s2] sm:$0xff]
      %v278 = vld [vmem:[%s2 + $0x8] sm:$0xff]
      %v279 = vld [vmem:[%s2 + $0x10] sm:$0xff]
      %v280 = vld [vmem:[%s2 + $0x18] sm:$0xff]
      %v281 = vld [vmem:[%s2 + $0x20] sm:$0xff]
      %v282 = vld [vmem:[%s2 + $0x28] sm:$0xff]
      %v283 = vld [vmem:[%s2 + $0x30] sm:$0xff]
      %v284 = vld [vmem:[%s2 + $0x38] sm:$0xff]
      %vm285 = vcmask 261120
      %v287 = vsel %vm285, %v261, 0
      %289 = vmatprep.subr.mxu0 0.0
      %290 = vmatpush1.msra.mxu0 0.0
      %291 = vmatprep.subr.mxu0 0.0
      %292 = vmatpush1.msra.mxu0 0.0
      %293 = vmatprep.subr.mxu0 0.0
      %294 = vmatpush1.msra.mxu0 0.0
      %295 = vmatprep.subr.mxu0 0.0
      %296 = vmatpush1.msra.mxu0 0.0
      %297 = vmatprep.subr.mxu0 0.0
      %298 = vmatpush1.msra.mxu0 0.0
      %299 = vmatprep.subr.mxu0 0.0
      %300 = vmatpush1.msra.mxu0 0.0
      %301 = vmatprep.subr.mxu0 0.0
      %302 = vmatpush1.msra.mxu0 0.0
      %303 = vmatprep.subr.mxu0 0.0
      %304 = vmatpush1.msra.mxu0 0.0
      %305 = vmatprep.subr.mxu0 0.0
      %306 = vmatpush1.msra.mxu0 0.0
      %307 = vmatprep.subr.mxu0 0.0
      %308 = vmatpush1.msra.mxu0 0.0
      %309 = vmatprep.subr.mxu0 0.0
      %310 = vmatpush1.msra.mxu0 0.0
      %311 = vmatprep.subr.mxu0 0.0
      %312 = vmatpush1.msra.mxu0 0.0
      %313 = vmatprep.subr.mxu0 %v284
      %314 = vmatpush1.msra.mxu0 %v283
      %315 = vmatprep.subr.mxu0 %v282
      %316 = vmatpush1.msra.mxu0 %v281
      %317 = vmatprep.subr.mxu0 %v280
      %318 = vmatpush1.msra.mxu0 %v279
      %319 = vmatprep.subr.mxu0 %v278
      %320 = vmatpush1.msra.mxu0 %v277
      %321 = vmatprep.subr.mxu0 0.0
      %322 = vmatpush2.msra.mxu0 0.0
      %323 = vmatprep.subr.mxu0 0.0
      %324 = vmatpush2.msra.mxu0 0.0
      %325 = vmatprep.subr.mxu0 0.0
      %326 = vmatpush2.msra.mxu0 0.0
      %327 = vmatprep.subr.mxu0 0.0
      %328 = vmatpush2.msra.mxu0 0.0
      %329 = vmatprep.subr.mxu0 0.0
      %330 = vmatpush2.msra.mxu0 0.0
      %331 = vmatprep.subr.mxu0 0.0
      %332 = vmatpush2.msra.mxu0 0.0
      %333 = vmatprep.subr.mxu0 0.0
      %334 = vmatpush2.msra.mxu0 0.0
      %335 = vmatprep.subr.mxu0 0.0
      %336 = vmatpush2.msra.mxu0 0.0
      %337 = vmatprep.subr.mxu0 0.0
      %338 = vmatpush2.msra.mxu0 0.0
      %339 = vmatprep.subr.mxu0 0.0
      %340 = vmatpush2.msra.mxu0 0.0
      %341 = vmatprep.subr.mxu0 0.0
      %342 = vmatpush2.msra.mxu0 0.0
      %343 = vmatprep.subr.mxu0 0.0
      %344 = vmatpush2.msra.mxu0 0.0
      %345 = vmatprep.subr.mxu0 0.0
      %346 = vmatpush2.msra.mxu0 0.0
      %347 = vmatprep.subr.mxu0 0.0
      %348 = vmatpush2.msra.mxu0 0.0
      %349 = vmatprep.subr.mxu0 0.0
      %350 = vmatpush2.msra.mxu0 0.0
      %351 = vmatprep.subr.mxu0 0.0
      %352 = vmatpush2.msra.mxu0 0.0
      %353 = vmatprep.mubr.f32.mxu0 0.0
      %354 = vmatmul.mubr.f32.gmra.mxu0 %v287
      %v355 = vpop.f32.mrf.mxu0
      %v356 = vadd.f32 0.0, %v355
      %v357 = vpop.f32.mrf.mxu0
      %v358 = vadd.f32 0.0, %v357
      %359 = vdwg.mxu0
      %v360 = vld [vmem:[%s3] sm:$0x1]
      %v362 = vlaneseq
      %v363 = vshrl.u32 %v362, 7
      %v364 = vsub.s32 0, %v363
      %v365 = vrot.slane %v360, %v364
      %v367 = vadd.f32 %v356, %v365
      %v368 = vmax.f32 %v367, 0.0
      %v369 = vld [vmem:[%s4] sm:$0xff]
      %v370 = vld [vmem:[%s4 + $0x8] sm:$0xff]
      %v371 = vld [vmem:[%s4 + $0x10] sm:$0xff]
      %v372 = vld [vmem:[%s4 + $0x18] sm:$0xff]
      %v373 = vld [vmem:[%s4 + $0x20] sm:$0xff]
      %v374 = vld [vmem:[%s4 + $0x28] sm:$0xff]
      %v375 = vld [vmem:[%s4 + $0x30] sm:$0xff]
      %v376 = vld [vmem:[%s4 + $0x38] sm:$0xff]
      %v377 = vld [vmem:[%s4 + $0x40] sm:$0xff]
      %v378 = vld [vmem:[%s4 + $0x48] sm:$0xff]
      %v379 = vld [vmem:[%s4 + $0x50] sm:$0xff]
      %v380 = vld [vmem:[%s4 + $0x58] sm:$0xff]
      %v381 = vld [vmem:[%s4 + $0x60] sm:$0xff]
      %v382 = vld [vmem:[%s4 + $0x68] sm:$0xff]
      %v383 = vld [vmem:[%s4 + $0x70] sm:$0xff]
      %v384 = vld [vmem:[%s4 + $0x78] sm:$0xff]
      %385 = vmatprep.subr.mxu0 0.0
      %386 = vmatpush1.msra.mxu0 %v384
      %387 = vmatprep.subr.mxu0 0.0
      %388 = vmatpush1.msra.mxu0 %v383
      %389 = vmatprep.subr.mxu0 0.0
      %390 = vmatpush1.msra.mxu0 %v382
      %391 = vmatprep.subr.mxu0 0.0
      %392 = vmatpush1.msra.mxu0 %v381
      %393 = vmatprep.subr.mxu0 0.0
      %394 = vmatpush1.msra.mxu0 %v380
      %395 = vmatprep.subr.mxu0 0.0
      %396 = vmatpush1.msra.mxu0 %v379
      %397 = vmatprep.subr.mxu0 0.0
      %398 = vmatpush1.msra.mxu0 %v378
      %399 = vmatprep.subr.mxu0 0.0
      %400 = vmatpush1.msra.mxu0 %v377
      %401 = vmatprep.subr.mxu0 0.0
      %402 = vmatpush1.msra.mxu0 %v376
      %403 = vmatprep.subr.mxu0 0.0
      %404 = vmatpush1.msra.mxu0 %v375
      %405 = vmatprep.subr.mxu0 0.0
      %406 = vmatpush1.msra.mxu0 %v374
      %407 = vmatprep.subr.mxu0 0.0
      %408 = vmatpush1.msra.mxu0 %v373
      %409 = vmatprep.subr.mxu0 0.0
      %410 = vmatpush1.msra.mxu0 %v372
      %411 = vmatprep.subr.mxu0 0.0
      %412 = vmatpush1.msra.mxu0 %v371
      %413 = vmatprep.subr.mxu0 0.0
      %414 = vmatpush1.msra.mxu0 %v370
      %415 = vmatprep.subr.mxu0 0.0
      %416 = vmatpush1.msra.mxu0 %v369
      %417 = vmatprep.subr.mxu0 0.0
      %418 = vmatpush2.msra.mxu0 0.0
      %419 = vmatprep.subr.mxu0 0.0
      %420 = vmatpush2.msra.mxu0 0.0
      %421 = vmatprep.subr.mxu0 0.0
      %422 = vmatpush2.msra.mxu0 0.0
      %423 = vmatprep.subr.mxu0 0.0
      %424 = vmatpush2.msra.mxu0 0.0
      %425 = vmatprep.subr.mxu0 0.0
      %426 = vmatpush2.msra.mxu0 0.0
      %427 = vmatprep.subr.mxu0 0.0
      %428 = vmatpush2.msra.mxu0 0.0
      %429 = vmatprep.subr.mxu0 0.0
      %430 = vmatpush2.msra.mxu0 0.0
      %431 = vmatprep.subr.mxu0 0.0
      %432 = vmatpush2.msra.mxu0 0.0
      %433 = vmatprep.subr.mxu0 0.0
      %434 = vmatpush2.msra.mxu0 0.0
      %435 = vmatprep.subr.mxu0 0.0
      %436 = vmatpush2.msra.mxu0 0.0
      %437 = vmatprep.subr.mxu0 0.0
      %438 = vmatpush2.msra.mxu0 0.0
      %439 = vmatprep.subr.mxu0 0.0
      %440 = vmatpush2.msra.mxu0 0.0
      %441 = vmatprep.subr.mxu0 0.0
      %442 = vmatpush2.msra.mxu0 0.0
      %443 = vmatprep.subr.mxu0 0.0
      %444 = vmatpush2.msra.mxu0 0.0
      %445 = vmatprep.subr.mxu0 0.0
      %446 = vmatpush2.msra.mxu0 0.0
      %447 = vmatprep.subr.mxu0 0.0
      %448 = vmatpush2.msra.mxu0 0.0
      %449 = vmatprep.mubr.f32.mxu0 0.0
      %450 = vmatmul.mubr.f32.gmra.mxu0 %v368
      %v451 = vpop.f32.mrf.mxu0
      %v452 = vadd.f32 0.0, %v451
      %v453 = vpop.f32.mrf.mxu0
      %454 = vdwg.mxu0
      %v455 = vsel %vm274, %v358, -inf
      %vm456 = vcmask 7168
      %v457 = vsel %vm456, %v455, -inf
      %v458 = vrot.slane %v457, 4
      %v459 = vmax.f32 %v457, %v458
      %v460 = vrot.slane %v459, 2
      %v461 = vmax.f32 %v459, %v460
      %v462 = vrot.slane %v461, 1
      %v463 = vmax.f32 %v461, %v462
      %v464 = vsub.f32 %v455, %v463
      %v465 = vmul.f32 %v464, 1.442695
      %v466 = vpow.pop %v465
      %v467 = vsel %vm456, %v466, 0.0
      %v468 = vrot.slane %v467, 4
      %v469 = vadd.f32 %v467, %v468
      %v470 = vrot.slane %v469, 2
      %v471 = vadd.f32 %v469, %v470
      %v472 = vrot.slane %v471, 1
      %v473 = vadd.f32 %v471, %v472
      %v474 = vrcp.pop %v473
      %v475 = vmul.f32 %v466, %v474
      %v476 = vsel %vm274, %v452, -inf
      %v477 = vsel %vm456, %v476, -inf
      %v478 = vrot.slane %v477, 4
      %v479 = vmax.f32 %v477, %v478
      %v480 = vrot.slane %v479, 2
      %v481 = vmax.f32 %v479, %v480
      %v482 = vrot.slane %v481, 1
      %v483 = vmax.f32 %v481, %v482
      %v484 = vsub.f32 %v476, %v483
      %v485 = vmul.f32 %v484, 1.442695
      %v486 = vpow.pop %v485
      %v487 = vsel %vm456, %v486, 0.0
      %v488 = vrot.slane %v487, 4
      %v489 = vadd.f32 %v487, %v488
      %v490 = vrot.slane %v489, 2
      %v491 = vadd.f32 %v489, %v490
      %v492 = vrot.slane %v491, 1
      %v493 = vadd.f32 %v491, %v492
      %v494 = vrcp.pop %v493
      %v495 = vmul.f32 %v486, %v494
      %496 = vset.pattern.permute.xlu0 0
      %497 = vperm.xlu0 %496, %v275
      %v498 = vpop.permute.xlu0 %497
      %vm499 = vcmp.eq.s32.totalorder %v498, 1
      %v500 = vsel %vm499, %v261, -inf
      %v501 = vsel %vm285, %v500, -inf
      %v502 = vrot.slane %v501, 4
      %v503 = vmax.f32 %v501, %v502
      %v504 = vrot.slane %v503, 2
      %v505 = vmax.f32 %v503, %v504
      %v506 = vrot.slane %v505, 1
      %v507 = vmax.f32 %v505, %v506
      %v508 = vcvt.s32.f32 %v264
      %v509 = vrcp.pop %v508
      %v510 = vmul.f32 1.0, %v509
      %512 = vset.pattern.permute.xlu0 0
      %513 = vperm.xlu0 %512, %v276
      %v514 = vpop.permute.xlu0 %513
      %v516 = vmul.f32 %v261, %v514
      %v517 = vsel %vm285, %v516, 0.0
      %v518 = vrot.slane %v517, 4
      %v519 = vadd.f32 %v517, %v518
      %v520 = vrot.slane %v519, 2
      %v521 = vadd.f32 %v519, %v520
      %v522 = vrot.slane %v521, 1
      %v523 = vadd.f32 %v521, %v522
      %525 = vset.pattern.permute.xlu0 0
      %526 = vperm.xlu0 %525, %v510
      %v527 = vpop.permute.xlu0 %526
      %v529 = vlaneseq
      %v530 = vshrl.u32 %v529, 7
      %v531 = vsub.s32 0, %v530
      %v532 = vrot.slane %v527, %v531
      %v533 = vmul.f32 %v523, %v532
      %535 = vset.pattern.permute.xlu0 0
      %536 = vperm.xlu0 %535, %v475
      %v537 = vpop.permute.xlu0 %536
      %v539 = vmul.f32 %v537, %v261
      %v540 = vsel %vm285, %v539, 0.0
      %v541 = vrot.slane %v540, 4
      %v542 = vadd.f32 %v540, %v541
      %v543 = vrot.slane %v542, 2
      %v544 = vadd.f32 %v542, %v543
      %v545 = vrot.slane %v544, 1
      %v546 = vadd.f32 %v544, %v545
      %548 = vset.pattern.permute.xlu0 0
      %549 = vperm.xlu0 %548, %v495
      %v550 = vpop.permute.xlu0 %549
      %v552 = vmul.f32 %v550, %v261
      %v553 = vsel %vm285, %v552, 0.0
      %v554 = vrot.slane %v553, 4
      %v555 = vadd.f32 %v553, %v554
      %v556 = vrot.slane %v555, 2
      %v557 = vadd.f32 %v555, %v556
      %v558 = vrot.slane %v557, 1
      %v559 = vadd.f32 %v557, %v558
      %vm560 = vcmask 1040384
      %v561 = vsel %vm560, %v507, %v533
      %vm562 = vcmask 1041408
      %v563 = vsel %vm562, %v561, %v523
      %vm564 = vcmask 1042432
      %v565 = vsel %vm564, %v563, %v546
      %vm566 = vcmask 1043456
      %v567 = vsel %vm566, %v565, %v559
      %v569 = vlaneseq
      %v570 = vshrl.u32 %v569, 7
      %v571 = vsub.s32 0, %v570
      %v572 = vrot.slane %v267, %v571
      %573 = vset.pattern.permute.xlu0 0
      %574 = vperm.xlu0 %573, %v572
      %v575 = vpop.permute.xlu0 %574
      %v577 = vmul.f32 %v567, %v575
      %vm578 = vcmask 258048
      %579 = vst.msk [vmem:[%s260] sm:$0x1f] %vm578, %v577
      %p580 = scmp.lt.s32.totalorder %s17, 1
      %s581 = scalar_select %p580, %s17, 1
      %s582 = smul.addr %s581, 8
      %s583 = scalar_lea.vmem %s6, %s582
      // Predicated region
      $region45: #{_pooling_call.1} parent=43 // pred_check
        %p584 = pneg %p171
      $region46: #{_pooling_call.1} parent=43 // pred_check_branch
        %586 = sbr.rel (%p584) target = $region48
      $region47: #{_pooling_call.1} parent=43 // pred_region
        _
      $region48: #{_pooling_call.1} parent=43 // pred_fallthru
        _
    $region44: #{_pooling_call.1} parent=5 // pred_fallthru
      _
    %p587 = scmp.le.s32.totalorder 2, %s12
    // Predicated region
    $region49: #{_pooling_call.1} parent=5 // pred_check
      %p588 = pneg %p587
    $region50: #{_pooling_call.1} parent=5 // pred_check_branch
      %590 = sbr.rel (%p588) target = $region52
    $region51: #{_pooling_call.1} parent=5 // pred_region
      %s591 = ssub.s32 %s12, 2
      // Predicated region
      $region53: #{_pooling_call.1} parent=51 // pred_check
        %p592 = pneg %p177
      $region54: #{_pooling_call.1} parent=51 // pred_check_branch
        %594 = sbr.rel (%p592) target = $region56
      $region55: #{_pooling_call.1} parent=51 // pred_region
        %p595 = scmp.lt.s32.totalorder %s18, 1
        %s596 = scalar_select %p595, %s18, 1
        %s597 = smul.addr %s596, 8
        %s598 = scalar_lea.vmem %s6, %s597
      $region56: #{_pooling_call.1} parent=51 // pred_fallthru
        _
    $region52: #{_pooling_call.1} parent=5 // pred_fallthru
      _
  $region6: #{_pooling_call.1} parent=0 // loop_footer
    %s16 = sadd.s32 1, %s12
  $region7: #{_pooling_call.1} parent=0 // loop_footer_branch
    %11 = sbr.rel target = $region3
  $region8: #{_pooling_call.1} parent=0 // loop_exit
    _

</llo_original>
